<compile_context>
chip_gen: v7x
topology: tpu7x:2x2x1
jax: 0.10.0
libtpu: 0.0.40
codegen_flags: <defaults>
</compile_context>

<pallas_src>
import jax
import jax.numpy as jnp
from jax import lax
from jax.experimental import pallas as pl
from jax.experimental.pallas import tpu as pltpu


def attention_kernel(x_ref, wcat_ref, bcat_ref, vw_ref, out_ref):
    # x_ref:    (S*B, E+D) [encoder_outputs | broadcast(prev_h)] flattened in
    #           the PyTorch .view(-1, .) row-major order (row k -> s=k//B, b=k%B).
    # wcat_ref: (A, E+D)   fused [U.weight | W.weight]
    # bcat_ref: (1, A)     U.bias + W.bias
    # vw_ref:   (1, A)     v.weight   (v.bias dropped: softmax shift-invariance)
    # out_ref:  (B, S)     attention weights (softmax over the last/lane axis)
    B, S = out_ref.shape
    dims = (((1,), (1,)), ((), ()))          # contract last dim of x with dim 1 of weight

    # Single fused U/W projection + bias + tanh -> (S*B, A), f32 accumulation.
    t = jnp.tanh(
        lax.dot_general(x_ref[...], wcat_ref[...], dims,
                        preferred_element_type=jnp.float32) + bcat_ref[...])

    # v-projection regrouped into the (B, S) output block: output row i takes
    # flat rows [i*S, (i+1)*S) of t (the faithful PyTorch .view(B, S) regroup,
    # batch-mixing included).  B is tiny and static -> unrolled; slices of t
    # are sublane-aligned (multiples of S = 8).  Rows are merged with selects
    # so there is exactly ONE output store.
    row_ids = lax.broadcasted_iota(jnp.int32, (B, S), 0)
    scores = jnp.zeros((B, S), jnp.float32)
    for i in range(B):
        ti = t[i * S:(i + 1) * S, :]                                         # (S, A)
        row = lax.dot_general(vw_ref[...], ti, dims,
                              preferred_element_type=jnp.float32)            # (1, S)
        scores = jnp.where(row_ids == i, jnp.broadcast_to(row, (B, S)), scores)

    # Row-wise softmax over the lane (S) axis, kept in f32.
    scores = scores - jnp.max(scores, axis=-1, keepdims=True)
    e = jnp.exp(scores)
    out_ref[...] = (e / jnp.sum(e, axis=-1, keepdims=True)).astype(out_ref.dtype)


@jax.jit
def attention_forward(prev_h_batch, encoder_outputs, w_cat, b_cat, v_w):
    """prev_h_batch: (1, B, D); encoder_outputs: (S, B, E);
    w_cat: (A, E+D) fused [U.weight | W.weight]; b_cat: (1, A); v_w: (1, A)."""
    S, B, E = encoder_outputs.shape
    A = w_cat.shape[0]
    D = w_cat.shape[1] - E

    # Free XLA-side "view" plumbing (kept out of the kernel): row k of x is
    # [enc[s, b] | h[b]] with k = s*B + b, i.e. exactly the operand of the
    # fused U/W projection for flat score index k.
    h = prev_h_batch.reshape(B, D)
    x = jnp.concatenate(
        [encoder_outputs, jnp.broadcast_to(h[None, :, :], (S, B, D))],
        axis=-1).reshape(S * B, E + D)

    vmem = pl.BlockSpec(memory_space=pltpu.MemorySpace.VMEM)
    return pl.pallas_call(
        attention_kernel,
        out_shape=jax.ShapeDtypeStruct((B, S), jnp.float32),
        in_specs=[vmem] * 4,
        out_specs=vmem,
    )(x, w_cat, b_cat, v_w)


if __name__ == "__main__":
    # Small shapes consistent with the module: seq=8, batch=2,
    # encoder_dim=32, decoder_dim=32, attention_dim=decoder_dim=32.
    S, B, E, D = 8, 2, 32, 32
    A = D

    key = jax.random.PRNGKey(0)
    k_enc, k_h, k_uw, k_ub, k_ww, k_wb, k_vw, k_vb = jax.random.split(key, 8)

    encoder_outputs = jax.random.normal(k_enc, (S, B, E), dtype=jnp.float32)
    prev_h_batch = jax.random.normal(k_h, (1, B, D), dtype=jnp.float32)

    # nn.Linear-style uniform(-1/sqrt(fan_in), 1/sqrt(fan_in)) init.
    bu, bw, bv = 1.0 / (E ** 0.5), 1.0 / (D ** 0.5), 1.0 / (A ** 0.5)
    u_w = jax.random.uniform(k_uw, (A, E), jnp.float32, -bu, bu)
    u_b = jax.random.uniform(k_ub, (A,), jnp.float32, -bu, bu)
    w_w = jax.random.uniform(k_ww, (A, D), jnp.float32, -bw, bw)
    w_b = jax.random.uniform(k_wb, (A,), jnp.float32, -bw, bw)
    v_w = jax.random.uniform(k_vw, (1, A), jnp.float32, -bv, bv)
    v_b = jax.random.uniform(k_vb, (1,), jnp.float32, -bv, bv)

    # Fused parameters, computed ONCE outside the per-step path (in a real
    # model this happens at parameter setup, not per decoder step).
    w_cat = jnp.concatenate([u_w, w_w], axis=1)      # (A, E+D)
    b_cat = (u_b + w_b).reshape(1, A)                # (1, A)
    # v_b is intentionally not passed: softmax is shift-invariant.

    attn = attention_forward(prev_h_batch, encoder_outputs, w_cat, b_cat, v_w)
    attn = jax.block_until_ready(attn)

    # Pure-JAX reference (direct transliteration of the PyTorch forward,
    # using the ORIGINAL unfused weights, v_b included).
    uh_ref = (encoder_outputs.reshape(-1, E) @ u_w.T + u_b).reshape(S, B, A)
    wq_ref = (prev_h_batch.reshape(-1, D) @ w_w.T + w_b)[None, :, :]     # (1, B, A)
    wquh_ref = jnp.tanh(wq_ref + uh_ref)                                 # (S, B, A)
    scores_ref = (wquh_ref.reshape(-1, A) @ v_w.T + v_b).reshape(B, S)
    attn_ref = jax.nn.softmax(scores_ref, axis=1)

    assert attn.shape == (B, S)
    assert jnp.allclose(attn, attn_ref, atol=1e-4, rtol=1e-4)
    assert jnp.allclose(jnp.sum(attn, axis=1), jnp.ones((B,)), atol=1e-5)

    print("KERNEL_OK")
</pallas_src>

<mosaic_0001>
module attributes {stable_mosaic.version = 11 : i64} {
  func.func @attention_kernel(%arg0: memref<16x64xf32, #tpu.memory_space<vmem>>, %arg1: memref<32x64xf32, #tpu.memory_space<vmem>>, %arg2: memref<1x32xf32, #tpu.memory_space<vmem>>, %arg3: memref<1x32xf32, #tpu.memory_space<vmem>>, %arg4: memref<2x8xf32, #tpu.memory_space<vmem>>) attributes {dimension_semantics = [], scalar_prefetch = 0 : i64, scratch_operands = 0 : i64, tpu.core_type = #tpu.core_type<tc>} {
    %c0 = arith.constant 0 : index
    %c0_0 = arith.constant 0 : index
    %0 = vector.load %arg0[%c0, %c0_0] : memref<16x64xf32, #tpu.memory_space<vmem>>, vector<16x64xf32>
    %c0_1 = arith.constant 0 : index
    %c0_2 = arith.constant 0 : index
    %1 = vector.load %arg1[%c0_1, %c0_2] : memref<32x64xf32, #tpu.memory_space<vmem>>, vector<32x64xf32>
    %cst = arith.constant dense<0.000000e+00> : vector<16x32xf32>
    %2 = tpu.matmul %0, %1, %cst {dimension_numbers = #tpu.dot_dimension_numbers<[1], [1], [0], [0], [0, 0, 1, 0], [], []>} : vector<16x64xf32>, vector<32x64xf32>, vector<16x32xf32> -> vector<16x32xf32>
    %c0_3 = arith.constant 0 : index
    %c0_4 = arith.constant 0 : index
    %3 = vector.load %arg2[%c0_3, %c0_4] : memref<1x32xf32, #tpu.memory_space<vmem>>, vector<1x32xf32>
    %4 = vector.broadcast %3 : vector<1x32xf32> to vector<16x32xf32>
    %5 = arith.addf %2, %4 : vector<16x32xf32>
    %6 = math.tanh %5 : vector<16x32xf32>
    %7 = tpu.iota {dimensions = array<i32: 0>} : vector<2x8xi32>
    %cst_5 = arith.constant 0.000000e+00 : f32
    %8 = vector.broadcast %cst_5 : f32 to vector<2x8xf32>
    %9 = vector.extract_strided_slice %6 {offsets = [0, 0], sizes = [8, 32], strides = [1, 1]} : vector<16x32xf32> to vector<8x32xf32>
    %c0_6 = arith.constant 0 : index
    %c0_7 = arith.constant 0 : index
    %10 = vector.load %arg3[%c0_6, %c0_7] : memref<1x32xf32, #tpu.memory_space<vmem>>, vector<1x32xf32>
    %cst_8 = arith.constant dense<0.000000e+00> : vector<1x8xf32>
    %11 = tpu.matmul %10, %9, %cst_8 {dimension_numbers = #tpu.dot_dimension_numbers<[1], [1], [0], [0], [0, 0, 1, 0], [], []>} : vector<1x32xf32>, vector<8x32xf32>, vector<1x8xf32> -> vector<1x8xf32>
    %c0_i32 = arith.constant 0 : i32
    %12 = vector.broadcast %c0_i32 : i32 to vector<2x8xi32>
    %13 = arith.cmpi eq, %7, %12 : vector<2x8xi32>
    %14 = vector.shape_cast %11 : vector<1x8xf32> to vector<1x8xf32>
    %15 = vector.broadcast %14 : vector<1x8xf32> to vector<2x8xf32>
    %16 = arith.select %13, %15, %8 : vector<2x8xi1>, vector<2x8xf32>
    %17 = vector.extract_strided_slice %6 {offsets = [8, 0], sizes = [8, 32], strides = [1, 1]} : vector<16x32xf32> to vector<8x32xf32>
    %c0_9 = arith.constant 0 : index
    %c0_10 = arith.constant 0 : index
    %18 = vector.load %arg3[%c0_9, %c0_10] : memref<1x32xf32, #tpu.memory_space<vmem>>, vector<1x32xf32>
    %cst_11 = arith.constant dense<0.000000e+00> : vector<1x8xf32>
    %19 = tpu.matmul %18, %17, %cst_11 {dimension_numbers = #tpu.dot_dimension_numbers<[1], [1], [0], [0], [0, 0, 1, 0], [], []>} : vector<1x32xf32>, vector<8x32xf32>, vector<1x8xf32> -> vector<1x8xf32>
    %c1_i32 = arith.constant 1 : i32
    %20 = vector.broadcast %c1_i32 : i32 to vector<2x8xi32>
    %21 = arith.cmpi eq, %7, %20 : vector<2x8xi32>
    %22 = vector.shape_cast %19 : vector<1x8xf32> to vector<1x8xf32>
    %23 = vector.broadcast %22 : vector<1x8xf32> to vector<2x8xf32>
    %24 = arith.select %21, %23, %16 : vector<2x8xi1>, vector<2x8xf32>
    %cst_12 = arith.constant dense<0xFF800000> : vector<2xf32>
    %25 = vector.multi_reduction <maximumf>, %24, %cst_12 [1] : vector<2x8xf32> to vector<2xf32>
    %26 = vector.shape_cast %25 : vector<2xf32> to vector<2x1xf32>
    %27 = vector.broadcast %26 : vector<2x1xf32> to vector<2x8xf32>
    %28 = arith.subf %24, %27 : vector<2x8xf32>
    %29 = math.exp %28 : vector<2x8xf32>
    %cst_13 = arith.constant dense<0.000000e+00> : vector<2xf32>
    %30 = vector.multi_reduction <add>, %29, %cst_13 [1] : vector<2x8xf32> to vector<2xf32>
    %31 = vector.shape_cast %30 : vector<2xf32> to vector<2x1xf32>
    %32 = vector.broadcast %31 : vector<2x1xf32> to vector<2x8xf32>
    %33 = arith.divf %29, %32 : vector<2x8xf32>
    %c0_14 = arith.constant 0 : index
    %c0_15 = arith.constant 0 : index
    %34 = vector.load %arg4[%c0_14, %c0_15] : memref<2x8xf32, #tpu.memory_space<vmem>>, vector<2x8xf32>
    tpu.vector_store %arg4[%c0_14, %c0_15], %33 {strides = array<i32>} : memref<2x8xf32, #tpu.memory_space<vmem>>, vector<2x8xf32>,
    return
  }
}

</mosaic_0001>

<llo_original>
// kernel: attention_forward.1
$region0: #{attention_forward.1}
  #allocation0 [shape = 'u32[]', space=smem, size = 0x4, offset = 0x4, fixed_abs, tag = 'smem constant byte address 0x4 - core index']
  #allocation1 [shape = 'u32[144,128]{1,0:T(1,128)}', space=vmem, size = 0x12000, scoped, tag = 'internal scratch']
  %s0 = inlined_call_operand.vmem [shape: f32[16,64], index: 0, kind: input, shape index: {}]
  %s1 = inlined_call_operand.vmem [shape: f32[32,64], index: 1, kind: input, shape index: {}]
  %s2 = inlined_call_operand.vmem [shape: f32[1,32], index: 2, kind: input, shape index: {}]
  %s3 = inlined_call_operand.vmem [shape: f32[1,32], index: 3, kind: input, shape index: {}]
  %s4 = inlined_call_operand.hbm [shape: f32[2,8], index: 4, kind: output, shape index: {}]
  %s5 = sld [smem:[#allocation0]]
  $region26: #{attention_forward.1} parent=0
    _
  %s7 = ssub.s32 1, %s5
  %s8 = scalar_select 0, %s7, %s5
  $region1: #{attention_forward.1} parent=0
    #allocation2 [shape = 'u8[1024]{0}', space=vmem, size = 0x400, scoped, tag = 'output window, operand 0, single buffered']
    #allocation3 [shape = 's32[1]{0}', space=sflag, size = 0x4, scoped, tag = 'scoped memory for attention_forward.1']
    %9 = vsyncpa [#allocation3], 0
    // Predicated region
    $region2: #{attention_forward.1} parent=1 // pred_check
      _
    $region3: #{attention_forward.1} parent=1 // pred_check_branch
      %11 = sbr.rel (0) target = $region5
    $region4: #{attention_forward.1} parent=1 // pred_region
      _
    $region5: #{attention_forward.1} parent=1 // pred_fallthru
      _
    // Predicated region
    $region6: #{attention_forward.1} parent=1 // pred_check
      _
    $region7: #{attention_forward.1} parent=1 // pred_check_branch
      %13 = sbr.rel (0) target = $region9
    $region8: #{attention_forward.1} parent=1 // pred_region
      _
    $region9: #{attention_forward.1} parent=1 // pred_fallthru
      _
    // Predicated region
    $region10: #{attention_forward.1} parent=1 // pred_check
      _
    $region11: #{attention_forward.1} parent=1 // pred_check_branch
      %15 = sbr.rel (0) target = $region13
    $region12: #{attention_forward.1} parent=1 // pred_region
      _
    $region13: #{attention_forward.1} parent=1 // pred_fallthru
      _
    // Predicated region
    $region14: #{attention_forward.1} parent=1 // pred_check
      _
    $region15: #{attention_forward.1} parent=1 // pred_check_branch
      %17 = sbr.rel (0) target = $region17
    $region16: #{attention_forward.1} parent=1 // pred_region
      _
    $region17: #{attention_forward.1} parent=1 // pred_fallthru
      _
    %v18 = vld [vmem:[%s0] sm:$0xff]
    %v19 = vld [vmem:[%s0 + $0x8] sm:$0xff]
    %v20 = vld [vmem:[%s1] sm:$0xff]
    %v21 = vld [vmem:[%s1 + $0x8] sm:$0xff]
    %v22 = vld [vmem:[%s1 + $0x10] sm:$0xff]
    %v23 = vld [vmem:[%s1 + $0x18] sm:$0xff]
    %v24 = vld [vmem:[%s2] sm:$0x1]
    %v26 = vlaneseq
    %v27 = vshrl.u32 %v26, 7
    %v28 = vsub.s32 0, %v27
    %v29 = vrot.slane %v24, %v28
    %vm31 = vcmask 523264
    %v33 = vsel %vm31, %v18, 0
    %v36 = vsel %vm31, %v19, 0
    %v39 = vsel %vm31, %v20, 0
    %v42 = vsel %vm31, %v21, 0
    %v45 = vsel %vm31, %v22, 0
    %v48 = vsel %vm31, %v23, 0
    %50 = vmatprep.subr.mxu0 0.0
    %51 = vmatpush1.xpose.msra.mxu0 %v39
    %52 = vmatprep.subr.mxu0 0.0
    %53 = vmatpush1.xpose.msra.mxu0 %v42
    %54 = vmatprep.subr.mxu0 0.0
    %55 = vmatpush1.xpose.msra.mxu0 %v45
    %56 = vmatprep.subr.mxu0 0.0
    %57 = vmatpush1.xpose.msra.mxu0 %v48
    %58 = vmatprep.subr.mxu0 0.0
    %59 = vmatpush1.xpose.msra.mxu0 0.0
    %60 = vmatprep.subr.mxu0 0.0
    %61 = vmatpush1.xpose.msra.mxu0 0.0
    %62 = vmatprep.subr.mxu0 0.0
    %63 = vmatpush1.xpose.msra.mxu0 0.0
    %64 = vmatprep.subr.mxu0 0.0
    %65 = vmatpush1.xpose.msra.mxu0 0.0
    %66 = vmatprep.subr.mxu0 0.0
    %67 = vmatpush1.xpose.msra.mxu0 0.0
    %68 = vmatprep.subr.mxu0 0.0
    %69 = vmatpush1.xpose.msra.mxu0 0.0
    %70 = vmatprep.subr.mxu0 0.0
    %71 = vmatpush1.xpose.msra.mxu0 0.0
    %72 = vmatprep.subr.mxu0 0.0
    %73 = vmatpush1.xpose.msra.mxu0 0.0
    %74 = vmatprep.subr.mxu0 0.0
    %75 = vmatpush1.xpose.msra.mxu0 0.0
    %76 = vmatprep.subr.mxu0 0.0
    %77 = vmatpush1.xpose.msra.mxu0 0.0
    %78 = vmatprep.subr.mxu0 0.0
    %79 = vmatpush1.xpose.msra.mxu0 0.0
    %80 = vmatprep.subr.mxu0 0.0
    %81 = vmatpush1.xpose.msra.mxu0 0.0
    %82 = vmatprep.subr.mxu0 0.0
    %83 = vmatpush1.xpose.msra.mxu0 0.0
    %84 = vmatprep.subr.mxu0 0.0
    %85 = vmatpush1.xpose.msra.mxu0 0.0
    %86 = vmatprep.subr.mxu0 0.0
    %87 = vmatpush1.xpose.msra.mxu0 0.0
    %88 = vmatprep.subr.mxu0 0.0
    %89 = vmatpush1.xpose.msra.mxu0 0.0
    %90 = vmatprep.subr.mxu0 0.0
    %91 = vmatpush1.xpose.msra.mxu0 0.0
    %92 = vmatprep.subr.mxu0 0.0
    %93 = vmatpush1.xpose.msra.mxu0 0.0
    %94 = vmatprep.subr.mxu0 0.0
    %95 = vmatpush1.xpose.msra.mxu0 0.0
    %96 = vmatprep.subr.mxu0 0.0
    %97 = vmatpush1.xpose.msra.mxu0 0.0
    %98 = vmatprep.subr.mxu0 0.0
    %99 = vmatpush1.xpose.msra.mxu0 0.0
    %100 = vmatprep.subr.mxu0 0.0
    %101 = vmatpush1.xpose.msra.mxu0 0.0
    %102 = vmatprep.subr.mxu0 0.0
    %103 = vmatpush1.xpose.msra.mxu0 0.0
    %104 = vmatprep.subr.mxu0 0.0
    %105 = vmatpush1.xpose.msra.mxu0 0.0
    %106 = vmatprep.subr.mxu0 0.0
    %107 = vmatpush1.xpose.msra.mxu0 0.0
    %108 = vmatprep.subr.mxu0 0.0
    %109 = vmatpush1.xpose.msra.mxu0 0.0
    %110 = vmatprep.subr.mxu0 0.0
    %111 = vmatpush1.xpose.msra.mxu0 0.0
    %112 = vmatprep.subr.mxu0 0.0
    %113 = vmatpush1.xpose.msra.mxu0 0.0
    %114 = vmatprep.mubr.f32.mxu0 0.0
    %115 = vmatmul.mubr.f32.gmra.mrb[0].mxu0 %v33
    %v116 = vpop.f32.mrb[0].mxu0
    %v117 = vadd.f32 %v29, %v116
    %v118 = vpop.f32.mrb[0].mxu0
    %119 = vmatprep.mubr.f32.mxu0 0.0
    %120 = vmatmul.mubr.f32.gmra.mrb[0].mxu0 %v36
    %v121 = vpop.f32.mrb[0].mxu0
    %v122 = vadd.f32 %v29, %v121
    %v123 = vpop.f32.mrb[0].mxu0
    %124 = vdwg.mxu0
    %v125 = vtanh.pop %v117
    %v126 = vtanh.pop %v122
    %v127 = vlaneseq
    %v128 = vshrl.u32 %v127, 7
    %v129 = vld [vmem:[%s3] sm:$0x1]
    %vm130 = vcmask 261120
    %v132 = vsel %vm130, %v129, 0
    %v135 = vsel %vm130, %v125, 0
    %137 = vmatprep.subr.mxu0 0.0
    %138 = vmatpush1.xpose.msra.mxu0 %v135
    %139 = vmatprep.subr.mxu0 0.0
    %140 = vmatpush1.xpose.msra.mxu0 0.0
    %141 = vmatprep.subr.mxu0 0.0
    %142 = vmatpush1.xpose.msra.mxu0 0.0
    %143 = vmatprep.subr.mxu0 0.0
    %144 = vmatpush1.xpose.msra.mxu0 0.0
    %145 = vmatprep.subr.mxu0 0.0
    %146 = vmatpush1.xpose.msra.mxu0 0.0
    %147 = vmatprep.subr.mxu0 0.0
    %148 = vmatpush1.xpose.msra.mxu0 0.0
    %149 = vmatprep.subr.mxu0 0.0
    %150 = vmatpush1.xpose.msra.mxu0 0.0
    %151 = vmatprep.subr.mxu0 0.0
    %152 = vmatpush1.xpose.msra.mxu0 0.0
    %153 = vmatprep.subr.mxu0 0.0
    %154 = vmatpush1.xpose.msra.mxu0 0.0
    %155 = vmatprep.subr.mxu0 0.0
    %156 = vmatpush1.xpose.msra.mxu0 0.0
    %157 = vmatprep.subr.mxu0 0.0
    %158 = vmatpush1.xpose.msra.mxu0 0.0
    %159 = vmatprep.subr.mxu0 0.0
    %160 = vmatpush1.xpose.msra.mxu0 0.0
    %161 = vmatprep.subr.mxu0 0.0
    %162 = vmatpush1.xpose.msra.mxu0 0.0
    %163 = vmatprep.subr.mxu0 0.0
    %164 = vmatpush1.xpose.msra.mxu0 0.0
    %165 = vmatprep.subr.mxu0 0.0
    %166 = vmatpush1.xpose.msra.mxu0 0.0
    %167 = vmatprep.subr.mxu0 0.0
    %168 = vmatpush1.xpose.msra.mxu0 0.0
    %169 = vmatprep.subr.mxu0 0.0
    %170 = vmatpush1.xpose.msra.mxu0 0.0
    %171 = vmatprep.subr.mxu0 0.0
    %172 = vmatpush1.xpose.msra.mxu0 0.0
    %173 = vmatprep.subr.mxu0 0.0
    %174 = vmatpush1.xpose.msra.mxu0 0.0
    %175 = vmatprep.subr.mxu0 0.0
    %176 = vmatpush1.xpose.msra.mxu0 0.0
    %177 = vmatprep.subr.mxu0 0.0
    %178 = vmatpush1.xpose.msra.mxu0 0.0
    %179 = vmatprep.subr.mxu0 0.0
    %180 = vmatpush1.xpose.msra.mxu0 0.0
    %181 = vmatprep.subr.mxu0 0.0
    %182 = vmatpush1.xpose.msra.mxu0 0.0
    %183 = vmatprep.subr.mxu0 0.0
    %184 = vmatpush1.xpose.msra.mxu0 0.0
    %185 = vmatprep.subr.mxu0 0.0
    %186 = vmatpush1.xpose.msra.mxu0 0.0
    %187 = vmatprep.subr.mxu0 0.0
    %188 = vmatpush1.xpose.msra.mxu0 0.0
    %189 = vmatprep.subr.mxu0 0.0
    %190 = vmatpush1.xpose.msra.mxu0 0.0
    %191 = vmatprep.subr.mxu0 0.0
    %192 = vmatpush1.xpose.msra.mxu0 0.0
    %193 = vmatprep.subr.mxu0 0.0
    %194 = vmatpush1.xpose.msra.mxu0 0.0
    %195 = vmatprep.subr.mxu0 0.0
    %196 = vmatpush1.xpose.msra.mxu0 0.0
    %197 = vmatprep.subr.mxu0 0.0
    %198 = vmatpush1.xpose.msra.mxu0 0.0
    %199 = vmatprep.subr.mxu0 0.0
    %200 = vmatpush1.xpose.msra.mxu0 0.0
    %201 = vmatprep.mubr.f32.mxu0 0.0
    %202 = vmatmul.mubr.f32.gmra.mrb[0].mxu0 %v132
    %v203 = vpop.f32.mrb[0].mxu0
    %v204 = vadd.f32 0.0, %v203
    %v205 = vpop.f32.mrb[0].mxu0
    %206 = vdwg.mxu0
    %vm207 = vcmp.eq.s32.totalorder %v128, 0
    %v208 = vlaneseq
    %v209 = vshrl.u32 %v208, 7
    %v210 = vsub.s32 0, %v209
    %v211 = vrot.slane %v204, %v210
    %v212 = vsel %vm207, %v211, 0.0
    %v214 = vsel %vm130, %v126, 0
    %216 = vmatprep.subr.mxu0 0.0
    %217 = vmatpush1.xpose.msra.mxu0 %v214
    %218 = vmatprep.subr.mxu0 0.0
    %219 = vmatpush1.xpose.msra.mxu0 0.0
    %220 = vmatprep.subr.mxu0 0.0
    %221 = vmatpush1.xpose.msra.mxu0 0.0
    %222 = vmatprep.subr.mxu0 0.0
    %223 = vmatpush1.xpose.msra.mxu0 0.0
    %224 = vmatprep.subr.mxu0 0.0
    %225 = vmatpush1.xpose.msra.mxu0 0.0
    %226 = vmatprep.subr.mxu0 0.0
    %227 = vmatpush1.xpose.msra.mxu0 0.0
    %228 = vmatprep.subr.mxu0 0.0
    %229 = vmatpush1.xpose.msra.mxu0 0.0
    %230 = vmatprep.subr.mxu0 0.0
    %231 = vmatpush1.xpose.msra.mxu0 0.0
    %232 = vmatprep.subr.mxu0 0.0
    %233 = vmatpush1.xpose.msra.mxu0 0.0
    %234 = vmatprep.subr.mxu0 0.0
    %235 = vmatpush1.xpose.msra.mxu0 0.0
    %236 = vmatprep.subr.mxu0 0.0
    %237 = vmatpush1.xpose.msra.mxu0 0.0
    %238 = vmatprep.subr.mxu0 0.0
    %239 = vmatpush1.xpose.msra.mxu0 0.0
    %240 = vmatprep.subr.mxu0 0.0
    %241 = vmatpush1.xpose.msra.mxu0 0.0
    %242 = vmatprep.subr.mxu0 0.0
    %243 = vmatpush1.xpose.msra.mxu0 0.0
    %244 = vmatprep.subr.mxu0 0.0
    %245 = vmatpush1.xpose.msra.mxu0 0.0
    %246 = vmatprep.subr.mxu0 0.0
    %247 = vmatpush1.xpose.msra.mxu0 0.0
    %248 = vmatprep.subr.mxu0 0.0
    %249 = vmatpush1.xpose.msra.mxu0 0.0
    %250 = vmatprep.subr.mxu0 0.0
    %251 = vmatpush1.xpose.msra.mxu0 0.0
    %252 = vmatprep.subr.mxu0 0.0
    %253 = vmatpush1.xpose.msra.mxu0 0.0
    %254 = vmatprep.subr.mxu0 0.0
    %255 = vmatpush1.xpose.msra.mxu0 0.0
    %256 = vmatprep.subr.mxu0 0.0
    %257 = vmatpush1.xpose.msra.mxu0 0.0
    %258 = vmatprep.subr.mxu0 0.0
    %259 = vmatpush1.xpose.msra.mxu0 0.0
    %260 = vmatprep.subr.mxu0 0.0
    %261 = vmatpush1.xpose.msra.mxu0 0.0
    %262 = vmatprep.subr.mxu0 0.0
    %263 = vmatpush1.xpose.msra.mxu0 0.0
    %264 = vmatprep.subr.mxu0 0.0
    %265 = vmatpush1.xpose.msra.mxu0 0.0
    %266 = vmatprep.subr.mxu0 0.0
    %267 = vmatpush1.xpose.msra.mxu0 0.0
    %268 = vmatprep.subr.mxu0 0.0
    %269 = vmatpush1.xpose.msra.mxu0 0.0
    %270 = vmatprep.subr.mxu0 0.0
    %271 = vmatpush1.xpose.msra.mxu0 0.0
    %272 = vmatprep.subr.mxu0 0.0
    %273 = vmatpush1.xpose.msra.mxu0 0.0
    %274 = vmatprep.subr.mxu0 0.0
    %275 = vmatpush1.xpose.msra.mxu0 0.0
    %276 = vmatprep.subr.mxu0 0.0
    %277 = vmatpush1.xpose.msra.mxu0 0.0
    %278 = vmatprep.subr.mxu0 0.0
    %279 = vmatpush1.xpose.msra.mxu0 0.0
    %280 = vmatprep.mubr.f32.mxu0 0.0
    %281 = vmatmul.mubr.f32.gmra.mrb[0].mxu0 %v132
    %v282 = vpop.f32.mrb[0].mxu0
    %v283 = vadd.f32 0.0, %v282
    %v284 = vpop.f32.mrb[0].mxu0
    %285 = vdwg.mxu0
    %vm286 = vcmp.eq.s32.totalorder %v128, 1
    %v287 = vlaneseq
    %v288 = vshrl.u32 %v287, 7
    %v289 = vsub.s32 0, %v288
    %v290 = vrot.slane %v283, %v289
    %v291 = vsel %vm286, %v290, %v212
    %vm292 = vcmask 58368
    %v293 = vsel %vm292, %v291, -inf
    %294 = vmax.xlane.f32.xlu0 %v293
    %v295 = vpop.xlane.xlu0 %294
    %v296 = vsub.f32 %v291, %v295
    %v297 = vmul.f32 %v296, 1.442695
    %v298 = vpow.pop %v297
    %v299 = vsel %vm292, %v298, 0.0
    %300 = vadd.xlane.f32.xlu0 %v299
    %v301 = vpop.xlane.xlu0 %300
    %v302 = vrcp.pop %v301
    %v303 = vmul.f32 %v298, %v302
    %304 = vst.msk [vmem:[#allocation2] sm:$0x3] %vm292, %v303
    // Predicated region
    $region18: #{attention_forward.1} parent=1 // pred_check
      _
    $region19: #{attention_forward.1} parent=1 // pred_check_branch
      %306 = sbr.rel (0) target = $region21
    $region20: #{attention_forward.1} parent=1 // pred_region
      %s308 = ssub.s32 32, 32
      %309 = vsyncadd [#allocation3], %s308
      %s311 = sshll.u32 [#allocation2], 4
      %s312 = int_to_ptr.vmem [resolvable:$true] %s311
      %314 = dma.vmem_to_hbm [thread:$0]  %s312, 32, %s4, [#allocation3]
    $region21: #{attention_forward.1} parent=1 // pred_fallthru
      _
    // Predicated region
    $region22: #{attention_forward.1} parent=1 // pred_check
      _
    $region23: #{attention_forward.1} parent=1 // pred_check_branch
      %316 = sbr.rel (0) target = $region25
    $region24: #{attention_forward.1} parent=1 // pred_region
      %317 = dma.done [#allocation3], 32
    $region25: #{attention_forward.1} parent=1 // pred_fallthru
      _
    %318 = vsyncpa [#allocation3], 1

</llo_original>
